<compile_context>
chip_gen: v6e
topology: v6e:2x2x1
jax: 0.10.0
libtpu: 0.0.40
codegen_flags: <defaults>
</compile_context>

<pallas_src>
import functools

import jax
import jax.numpy as jnp
from jax import lax
from jax.experimental import pallas as pl
from jax.experimental.pallas import tpu as pltpu


def _linkpred_kernel(xs_ref, xd_ref, w1s_ref, w1d_ref, b1_ref, w2_ref, b2_ref,
                     out_ref):
    """One edge tile.

    xs_ref : [block_e, n_inp]      bf16  src endpoint features (edge-major rows)
    xd_ref : [block_e, n_inp]      bf16  dst endpoint features
    w1s_ref: [n_inp, n_inp]        bf16  fc1 weight, src half, torch (out, in)
    w1d_ref: [n_inp, n_inp]        bf16  fc1 weight, dst half, torch (out, in)
    b1_ref : [n_inp, 1]            f32
    w2_ref : [n_classes, n_inp]    bf16  fc2 weight, torch (out, in)
    b2_ref : [n_classes, 1]        f32
    out_ref: [n_classes, block_e]  f32   scores, feature-major (lane-dense)
    """
    f32 = jnp.float32
    # Contract the feature axis of both operands: W[o,k] * X[e,k] -> [o, e].
    dn = (((1,), (1,)), ((), ()))

    xs = xs_ref[...].astype(f32)
    xd = xd_ref[...].astype(f32)

    # fc1 on the (virtually) concatenated features: two K = n_inp matmuls
    # accumulated in f32 == one K = 2*n_inp matmul on the concat.
    h = lax.dot_general(w1s_ref[...].astype(f32), xs, dn,
                        preferred_element_type=f32)
    h = h + lax.dot_general(w1d_ref[...].astype(f32), xd, dn,
                            preferred_element_type=f32)
    h = jnp.maximum(h + b1_ref[...], 0.0)                  # bias + ReLU in f32

    # fc2 -> [n_classes, block_e], lane-dense store.
    y = jnp.dot(w2_ref[...].astype(f32), h, preferred_element_type=f32)
    out_ref[...] = (y + b2_ref[...]).astype(out_ref.dtype)


@functools.partial(jax.jit, static_argnames=("block_e", "compute_dtype"))
def link_predictor_forward(src, dst, node_feat, w1, b1, w2, b2,
                           *, block_e=2048, compute_dtype=jnp.bfloat16):
    """
    src, dst  : int32 [E]                edge endpoints
    node_feat : f32   [N, n_inp]
    w1        : f32   [2*n_inp, n_inp]   fc1 weight (transposed from torch (out, in))
    b1        : f32   [n_inp]
    w2        : f32   [n_inp, n_classes] fc2 weight (transposed from torch (out, in))
    b2        : f32   [n_classes]
    returns   : f32   [E, n_classes]
    """
    n_inp = node_feat.shape[1]
    n_classes = w2.shape[1]
    E = src.shape[0]

    # Tile size: large (amortizes ~0.35 us per-grid-step overhead), multiple of
    # 256 (MXU/lane friendly on all generations), but never much larger than
    # the edge count itself.
    block_e = min(block_e, max(256, pl.cdiv(E, 256) * 256))

    # Pad edge count to a multiple of the tile; padded rows use node 0 (N>=1
    # assumed) and are sliced off after the call.
    e_pad = pl.cdiv(E, block_e) * block_e
    if e_pad != E:
        src = jnp.pad(src, (0, e_pad - E))
        dst = jnp.pad(dst, (0, e_pad - E))

    # Contiguous row gathers in the streaming dtype.  No transposed node_feat
    # copy and no [2*n_inp, E] concat slab is ever written to HBM.
    nf = node_feat.astype(compute_dtype)           # [N, n_inp]
    xs = nf[src]                                    # [e_pad, n_inp]
    xd = nf[dst]                                    # [e_pad, n_inp]

    # fc1 weight split into src/dst halves, torch (out, in) layout.
    w1s = w1[:n_inp, :].T.astype(compute_dtype)     # [n_inp, n_inp]
    w1d = w1[n_inp:, :].T.astype(compute_dtype)     # [n_inp, n_inp]
    w2_t = w2.T.astype(compute_dtype)               # [n_classes, n_inp]
    b1_c = b1.astype(jnp.float32).reshape(n_inp, 1)
    b2_c = b2.astype(jnp.float32).reshape(n_classes, 1)

    grid = (e_pad // block_e,)

    # VMEM per step (double-buffered): 2 * block_e*n_inp*2 B inputs +
    # n_classes*block_e*4 B output + tiny weights — well under the default
    # scoped limit for any sane n_inp; raise vmem_limit_bytes if n_inp grows
    # into the thousands.
    out_t = pl.pallas_call(
        _linkpred_kernel,
        out_shape=jax.ShapeDtypeStruct((n_classes, e_pad), jnp.float32),
        grid_spec=pltpu.PrefetchScalarGridSpec(
            num_scalar_prefetch=0,
            grid=grid,
            in_specs=[
                pl.BlockSpec((block_e, n_inp), lambda i: (i, 0)),    # src feats (streamed)
                pl.BlockSpec((block_e, n_inp), lambda i: (i, 0)),    # dst feats (streamed)
                pl.BlockSpec((n_inp, n_inp), lambda i: (0, 0)),      # W1 src half (resident)
                pl.BlockSpec((n_inp, n_inp), lambda i: (0, 0)),      # W1 dst half (resident)
                pl.BlockSpec((n_inp, 1), lambda i: (0, 0)),          # b1
                pl.BlockSpec((n_classes, n_inp), lambda i: (0, 0)),  # W2
                pl.BlockSpec((n_classes, 1), lambda i: (0, 0)),      # b2
            ],
            out_specs=pl.BlockSpec((n_classes, block_e), lambda i: (0, i)),
        ),
        compiler_params=pltpu.CompilerParams(
            dimension_semantics=("parallel",)),
    )(xs, xd, w1s, w1d, b1_c, w2_t, b2_c)

    # Back to edge-major [E, n_classes] in the feature dtype (tiny transpose).
    return out_t[:, :E].T.astype(node_feat.dtype)


def _torch_linear_init(key, fan_in, fan_out):
    """Deterministic init matching nn.Linear's U(-1/sqrt(fan_in), 1/sqrt(fan_in))."""
    kw, kb = jax.random.split(key)
    bound = 1.0 / (fan_in ** 0.5)
    # weight stored as [fan_in, fan_out] (transposed w.r.t. torch's (out, in))
    w = jax.random.uniform(kw, (fan_in, fan_out), jnp.float32, -bound, bound)
    b = jax.random.uniform(kb, (fan_out,), jnp.float32, -bound, bound)
    return w, b


if __name__ == "__main__":
    key = jax.random.PRNGKey(0)
    k_feat, k_src, k_dst, k_fc1, k_fc2 = jax.random.split(key, 5)

    # Small, self-consistent shapes.
    n_nodes = 16
    n_inp = 32
    n_classes = 8
    n_edges = 200          # deliberately NOT a multiple of the tile; wrapper pads

    node_feat = jax.random.normal(k_feat, (n_nodes, n_inp), jnp.float32)
    src = jax.random.randint(k_src, (n_edges,), 0, n_nodes, jnp.int32)
    dst = jax.random.randint(k_dst, (n_edges,), 0, n_nodes, jnp.int32)

    # Parameters (deterministic, torch-Linear-style init).
    w1, b1 = _torch_linear_init(k_fc1, 2 * n_inp, n_inp)       # fc1: 2*n_inp -> n_inp
    w2, b2 = _torch_linear_init(k_fc2, n_inp, n_classes)       # fc2: n_inp  -> n_classes

    scores = link_predictor_forward(src, dst, node_feat, w1, b1, w2, b2)
    scores = jax.block_until_ready(scores)
    assert scores.shape == (n_edges, n_classes)

    # Reference #1: exact kernel numerics — bf16-rounded operands, f32 matmuls.
    x_cat = jnp.concatenate([node_feat[src], node_feat[dst]], axis=1)
    xb = x_cat.astype(jnp.bfloat16).astype(jnp.float32)
    w1b = w1.astype(jnp.bfloat16).astype(jnp.float32)
    w2b = w2.astype(jnp.bfloat16).astype(jnp.float32)
    hi = lax.Precision.HIGHEST
    h_ref = jnp.maximum(jnp.dot(xb, w1b, precision=hi) + b1, 0.0)
    ref_mixed = jnp.dot(h_ref, w2b, precision=hi) + b2
    assert jnp.allclose(scores, ref_mixed, atol=5e-3, rtol=5e-3), \
        "mismatch vs bf16-quantized / f32-accumulate reference"

    # Reference #2: original pure-f32 torch semantics (loose tol for bf16 streaming).
    ref_f32 = jnp.maximum(jnp.dot(x_cat, w1, precision=hi) + b1, 0.0)
    ref_f32 = jnp.dot(ref_f32, w2, precision=hi) + b2
    assert jnp.allclose(scores, ref_f32, atol=5e-2, rtol=5e-2), \
        "mismatch vs f32 reference"

    print("KERNEL_OK")
</pallas_src>

<mosaic_0001>
module attributes {stable_mosaic.version = 11 : i64} {
  func.func @_linkpred_kernel(%arg0: i32, %arg1: memref<256x32xbf16, #tpu.memory_space<vmem>>, %arg2: memref<256x32xbf16, #tpu.memory_space<vmem>>, %arg3: memref<32x32xbf16, #tpu.memory_space<vmem>>, %arg4: memref<32x32xbf16, #tpu.memory_space<vmem>>, %arg5: memref<32x1xf32, #tpu.memory_space<vmem>>, %arg6: memref<8x32xbf16, #tpu.memory_space<vmem>>, %arg7: memref<8x1xf32, #tpu.memory_space<vmem>>, %arg8: memref<8x256xf32, #tpu.memory_space<vmem>>) attributes {dimension_semantics = [#tpu.dimension_semantics<parallel>], iteration_bounds = array<i64: 1>, scalar_prefetch = 0 : i64, scratch_operands = 0 : i64, tpu.core_type = #tpu.core_type<tc>, window_params = [{transform_indices = @transform_0, window_bounds = array<i64: 256, 32>}, {transform_indices = @transform_1, window_bounds = array<i64: 256, 32>}, {pipeline_mode = #tpu.pipeline_mode<synchronous>, transform_indices = @transform_2, window_bounds = array<i64: 32, 32>}, {pipeline_mode = #tpu.pipeline_mode<synchronous>, transform_indices = @transform_3, window_bounds = array<i64: 32, 32>}, {pipeline_mode = #tpu.pipeline_mode<synchronous>, transform_indices = @transform_4, window_bounds = array<i64: 32, 1>}, {pipeline_mode = #tpu.pipeline_mode<synchronous>, transform_indices = @transform_5, window_bounds = array<i64: 8, 32>}, {pipeline_mode = #tpu.pipeline_mode<synchronous>, transform_indices = @transform_6, window_bounds = array<i64: 8, 1>}, {transform_indices = @transform_7, window_bounds = array<i64: 8, 256>}]} {
    %c0 = arith.constant 0 : index
    %c0_0 = arith.constant 0 : index
    %0 = vector.load %arg1[%c0, %c0_0] : memref<256x32xbf16, #tpu.memory_space<vmem>>, vector<256x32xbf16>
    %1 = arith.extf %0 : vector<256x32xbf16> to vector<256x32xf32>
    %c0_1 = arith.constant 0 : index
    %c0_2 = arith.constant 0 : index
    %2 = vector.load %arg2[%c0_1, %c0_2] : memref<256x32xbf16, #tpu.memory_space<vmem>>, vector<256x32xbf16>
    %3 = arith.extf %2 : vector<256x32xbf16> to vector<256x32xf32>
    %c0_3 = arith.constant 0 : index
    %c0_4 = arith.constant 0 : index
    %4 = vector.load %arg3[%c0_3, %c0_4] : memref<32x32xbf16, #tpu.memory_space<vmem>>, vector<32x32xbf16>
    %5 = arith.extf %4 : vector<32x32xbf16> to vector<32x32xf32>
    %cst = arith.constant dense<0.000000e+00> : vector<32x256xf32>
    %6 = tpu.matmul %5, %1, %cst {dimension_numbers = #tpu.dot_dimension_numbers<[1], [1], [0], [0], [0, 0, 1, 0], [], []>} : vector<32x32xf32>, vector<256x32xf32>, vector<32x256xf32> -> vector<32x256xf32>
    %c0_5 = arith.constant 0 : index
    %c0_6 = arith.constant 0 : index
    %7 = vector.load %arg4[%c0_5, %c0_6] : memref<32x32xbf16, #tpu.memory_space<vmem>>, vector<32x32xbf16>
    %8 = arith.extf %7 : vector<32x32xbf16> to vector<32x32xf32>
    %cst_7 = arith.constant dense<0.000000e+00> : vector<32x256xf32>
    %9 = tpu.matmul %8, %3, %cst_7 {dimension_numbers = #tpu.dot_dimension_numbers<[1], [1], [0], [0], [0, 0, 1, 0], [], []>} : vector<32x32xf32>, vector<256x32xf32>, vector<32x256xf32> -> vector<32x256xf32>
    %10 = arith.addf %6, %9 : vector<32x256xf32>
    %c0_8 = arith.constant 0 : index
    %c0_9 = arith.constant 0 : index
    %11 = vector.load %arg5[%c0_8, %c0_9] : memref<32x1xf32, #tpu.memory_space<vmem>>, vector<32x1xf32>
    %12 = vector.broadcast %11 : vector<32x1xf32> to vector<32x256xf32>
    %13 = arith.addf %10, %12 : vector<32x256xf32>
    %cst_10 = arith.constant 0.000000e+00 : f32
    %14 = vector.broadcast %cst_10 : f32 to vector<32x256xf32>
    %15 = arith.maximumf %13, %14 : vector<32x256xf32>
    %c0_11 = arith.constant 0 : index
    %c0_12 = arith.constant 0 : index
    %16 = vector.load %arg6[%c0_11, %c0_12] : memref<8x32xbf16, #tpu.memory_space<vmem>>, vector<8x32xbf16>
    %17 = arith.extf %16 : vector<8x32xbf16> to vector<8x32xf32>
    %cst_13 = arith.constant dense<0.000000e+00> : vector<8x256xf32>
    %18 = tpu.matmul %17, %15, %cst_13 {dimension_numbers = #tpu.dot_dimension_numbers<[1], [0], [0], [1], [0, 0, 1, 1], [], []>} : vector<8x32xf32>, vector<32x256xf32>, vector<8x256xf32> -> vector<8x256xf32>
    %c0_14 = arith.constant 0 : index
    %c0_15 = arith.constant 0 : index
    %19 = vector.load %arg7[%c0_14, %c0_15] : memref<8x1xf32, #tpu.memory_space<vmem>>, vector<8x1xf32>
    %20 = vector.broadcast %19 : vector<8x1xf32> to vector<8x256xf32>
    %21 = arith.addf %18, %20 : vector<8x256xf32>
    %c0_16 = arith.constant 0 : index
    %c0_17 = arith.constant 0 : index
    %22 = vector.load %arg8[%c0_16, %c0_17] : memref<8x256xf32, #tpu.memory_space<vmem>>, vector<8x256xf32>
    tpu.vector_store %arg8[%c0_16, %c0_17], %21 {strides = array<i32>} : memref<8x256xf32, #tpu.memory_space<vmem>>, vector<8x256xf32>,
    return
  }
  func.func @transform_0(%arg0: i32) -> (i32, i32) {
    %c0_i32 = arith.constant 0 : i32
    %c0_i32_0 = arith.constant 0 : i32
    return %arg0, %c0_i32 : i32, i32
  }
  func.func @transform_1(%arg0: i32) -> (i32, i32) {
    %c0_i32 = arith.constant 0 : i32
    %c0_i32_0 = arith.constant 0 : i32
    return %arg0, %c0_i32 : i32, i32
  }
  func.func @transform_2(%arg0: i32) -> (i32, i32) {
    %c0_i32 = arith.constant 0 : i32
    %c0_i32_0 = arith.constant 0 : i32
    %c0_i32_1 = arith.constant 0 : i32
    return %c0_i32, %c0_i32_0 : i32, i32
  }
  func.func @transform_3(%arg0: i32) -> (i32, i32) {
    %c0_i32 = arith.constant 0 : i32
    %c0_i32_0 = arith.constant 0 : i32
    %c0_i32_1 = arith.constant 0 : i32
    return %c0_i32, %c0_i32_0 : i32, i32
  }
  func.func @transform_4(%arg0: i32) -> (i32, i32) {
    %c0_i32 = arith.constant 0 : i32
    %c0_i32_0 = arith.constant 0 : i32
    %c0_i32_1 = arith.constant 0 : i32
    return %c0_i32, %c0_i32_0 : i32, i32
  }
  func.func @transform_5(%arg0: i32) -> (i32, i32) {
    %c0_i32 = arith.constant 0 : i32
    %c0_i32_0 = arith.constant 0 : i32
    %c0_i32_1 = arith.constant 0 : i32
    return %c0_i32, %c0_i32_0 : i32, i32
  }
  func.func @transform_6(%arg0: i32) -> (i32, i32) {
    %c0_i32 = arith.constant 0 : i32
    %c0_i32_0 = arith.constant 0 : i32
    %c0_i32_1 = arith.constant 0 : i32
    return %c0_i32, %c0_i32_0 : i32, i32
  }
  func.func @transform_7(%arg0: i32) -> (i32, i32) {
    %c0_i32 = arith.constant 0 : i32
    %c0_i32_0 = arith.constant 0 : i32
    return %c0_i32, %arg0 : i32, i32
  }
}

</mosaic_0001>

<llo_original>
// kernel: link_predictor_forward.1
$region0: #{link_predictor_forward.1}
  #allocation0 [shape = 'u32[]', space=smem, size = 0x4, offset = 0x4, fixed_abs, tag = 'smem constant byte address 0x4 - core index']
  #allocation1 [shape = 'u32[144,128]{1,0:T(1,128)}', space=vmem, size = 0x12000, scoped, tag = 'internal scratch']
  %s0 = inlined_call_operand.vmem [shape: bf16[256,32], index: 0, kind: input, shape index: {}]
  %s1 = inlined_call_operand.vmem [shape: bf16[256,32], index: 1, kind: input, shape index: {}]
  %s2 = inlined_call_operand.vmem [shape: bf16[32,32], index: 2, kind: input, shape index: {}]
  %s3 = inlined_call_operand.vmem [shape: bf16[32,32], index: 3, kind: input, shape index: {}]
  %s4 = inlined_call_operand.vmem [shape: f32[32,1], index: 4, kind: input, shape index: {}]
  %s5 = inlined_call_operand.vmem [shape: bf16[8,32], index: 5, kind: input, shape index: {}]
  %s6 = inlined_call_operand.vmem [shape: f32[8,1], index: 6, kind: input, shape index: {}]
  %s7 = inlined_call_operand.vmem [shape: f32[8,256], index: 7, kind: output, shape index: {}]
  %s8 = sld [smem:[#allocation0]]
  $region38: #{link_predictor_forward.1} parent=0
    _
  %s10 = ssub.s32 1, %s8
  %s11 = scalar_select 0, %s10, %s8
  // Predicated region
  $region2: #{link_predictor_forward.1} parent=0 // pred_check
    _
  $region3: #{link_predictor_forward.1} parent=0 // pred_check_branch
    %13 = sbr.rel (0) target = $region5
  $region4: #{link_predictor_forward.1} parent=0 // pred_region
    _
  $region5: #{link_predictor_forward.1} parent=0 // pred_fallthru
    _
  // Predicated region
  $region6: #{link_predictor_forward.1} parent=0 // pred_check
    _
  $region7: #{link_predictor_forward.1} parent=0 // pred_check_branch
    %15 = sbr.rel (0) target = $region9
  $region8: #{link_predictor_forward.1} parent=0 // pred_region
    _
  $region9: #{link_predictor_forward.1} parent=0 // pred_fallthru
    _
  // Predicated region
  $region10: #{link_predictor_forward.1} parent=0 // pred_check
    _
  $region11: #{link_predictor_forward.1} parent=0 // pred_check_branch
    %17 = sbr.rel (0) target = $region13
  $region12: #{link_predictor_forward.1} parent=0 // pred_region
    _
  $region13: #{link_predictor_forward.1} parent=0 // pred_fallthru
    _
  // Predicated region
  $region14: #{link_predictor_forward.1} parent=0 // pred_check
    _
  $region15: #{link_predictor_forward.1} parent=0 // pred_check_branch
    %19 = sbr.rel (0) target = $region17
  $region16: #{link_predictor_forward.1} parent=0 // pred_region
    _
  $region17: #{link_predictor_forward.1} parent=0 // pred_fallthru
    _
  // Predicated region
  $region18: #{link_predictor_forward.1} parent=0 // pred_check
    _
  $region19: #{link_predictor_forward.1} parent=0 // pred_check_branch
    %21 = sbr.rel (0) target = $region21
  $region20: #{link_predictor_forward.1} parent=0 // pred_region
    _
  $region21: #{link_predictor_forward.1} parent=0 // pred_fallthru
    _
  // Predicated region
  $region22: #{link_predictor_forward.1} parent=0 // pred_check
    _
  $region23: #{link_predictor_forward.1} parent=0 // pred_check_branch
    %23 = sbr.rel (0) target = $region25
  $region24: #{link_predictor_forward.1} parent=0 // pred_region
    _
  $region25: #{link_predictor_forward.1} parent=0 // pred_fallthru
    _
  // Predicated region
  $region26: #{link_predictor_forward.1} parent=0 // pred_check
    _
  $region27: #{link_predictor_forward.1} parent=0 // pred_check_branch
    %25 = sbr.rel (0) target = $region29
  $region28: #{link_predictor_forward.1} parent=0 // pred_region
    _
  $region29: #{link_predictor_forward.1} parent=0 // pred_fallthru
    _
  %v26 = vld [vmem:[%s0] sm:$0xf]
  %v27 = vld [vmem:[%s0 + $0x4] sm:$0xf]
  %v28 = vld [vmem:[%s0 + $0x8] sm:$0xf]
  %v29 = vld [vmem:[%s0 + $0xc] sm:$0xf]
  %v30 = vld [vmem:[%s0 + $0x10] sm:$0xf]
  %v31 = vld [vmem:[%s0 + $0x14] sm:$0xf]
  %v32 = vld [vmem:[%s0 + $0x18] sm:$0xf]
  %v33 = vld [vmem:[%s0 + $0x1c] sm:$0xf]
  %v34 = vld [vmem:[%s0 + $0x20] sm:$0xf]
  %v35 = vld [vmem:[%s0 + $0x24] sm:$0xf]
  %v36 = vld [vmem:[%s0 + $0x28] sm:$0xf]
  %v37 = vld [vmem:[%s0 + $0x2c] sm:$0xf]
  %v38 = vld [vmem:[%s0 + $0x30] sm:$0xf]
  %v39 = vld [vmem:[%s0 + $0x34] sm:$0xf]
  %v40 = vld [vmem:[%s0 + $0x38] sm:$0xf]
  %v41 = vld [vmem:[%s0 + $0x3c] sm:$0xf]
  %v42 = vld [vmem:[%s0 + $0x40] sm:$0xf]
  %v43 = vld [vmem:[%s0 + $0x44] sm:$0xf]
  %v44 = vld [vmem:[%s0 + $0x48] sm:$0xf]
  %v45 = vld [vmem:[%s0 + $0x4c] sm:$0xf]
  %v46 = vld [vmem:[%s0 + $0x50] sm:$0xf]
  %v47 = vld [vmem:[%s0 + $0x54] sm:$0xf]
  %v48 = vld [vmem:[%s0 + $0x58] sm:$0xf]
  %v49 = vld [vmem:[%s0 + $0x5c] sm:$0xf]
  %v50 = vld [vmem:[%s0 + $0x60] sm:$0xf]
  %v51 = vld [vmem:[%s0 + $0x64] sm:$0xf]
  %v52 = vld [vmem:[%s0 + $0x68] sm:$0xf]
  %v53 = vld [vmem:[%s0 + $0x6c] sm:$0xf]
  %v54 = vld [vmem:[%s0 + $0x70] sm:$0xf]
  %v55 = vld [vmem:[%s0 + $0x74] sm:$0xf]
  %v56 = vld [vmem:[%s0 + $0x78] sm:$0xf]
  %v57 = vld [vmem:[%s0 + $0x7c] sm:$0xf]
  %v58 = vunpack.c.l.bf16 %v26
  %v59 = vunpack.c.l.bf16 %v27
  %v60 = vunpack.c.l.bf16 %v28
  %v61 = vunpack.c.l.bf16 %v29
  %v62 = vunpack.c.l.bf16 %v30
  %v63 = vunpack.c.l.bf16 %v31
  %v64 = vunpack.c.l.bf16 %v32
  %v65 = vunpack.c.l.bf16 %v33
  %v66 = vunpack.c.l.bf16 %v34
  %v67 = vunpack.c.l.bf16 %v35
  %v68 = vunpack.c.l.bf16 %v36
  %v69 = vunpack.c.l.bf16 %v37
  %v70 = vunpack.c.l.bf16 %v38
  %v71 = vunpack.c.l.bf16 %v39
  %v72 = vunpack.c.l.bf16 %v40
  %v73 = vunpack.c.l.bf16 %v41
  %v74 = vunpack.c.l.bf16 %v42
  %v75 = vunpack.c.l.bf16 %v43
  %v76 = vunpack.c.l.bf16 %v44
  %v77 = vunpack.c.l.bf16 %v45
  %v78 = vunpack.c.l.bf16 %v46
  %v79 = vunpack.c.l.bf16 %v47
  %v80 = vunpack.c.l.bf16 %v48
  %v81 = vunpack.c.l.bf16 %v49
  %v82 = vunpack.c.l.bf16 %v50
  %v83 = vunpack.c.l.bf16 %v51
  %v84 = vunpack.c.l.bf16 %v52
  %v85 = vunpack.c.l.bf16 %v53
  %v86 = vunpack.c.l.bf16 %v54
  %v87 = vunpack.c.l.bf16 %v55
  %v88 = vunpack.c.l.bf16 %v56
  %v89 = vunpack.c.l.bf16 %v57
  %v90 = vld [vmem:[%s1] sm:$0xf]
  %v91 = vld [vmem:[%s1 + $0x4] sm:$0xf]
  %v92 = vld [vmem:[%s1 + $0x8] sm:$0xf]
  %v93 = vld [vmem:[%s1 + $0xc] sm:$0xf]
  %v94 = vld [vmem:[%s1 + $0x10] sm:$0xf]
  %v95 = vld [vmem:[%s1 + $0x14] sm:$0xf]
  %v96 = vld [vmem:[%s1 + $0x18] sm:$0xf]
  %v97 = vld [vmem:[%s1 + $0x1c] sm:$0xf]
  %v98 = vld [vmem:[%s1 + $0x20] sm:$0xf]
  %v99 = vld [vmem:[%s1 + $0x24] sm:$0xf]
  %v100 = vld [vmem:[%s1 + $0x28] sm:$0xf]
  %v101 = vld [vmem:[%s1 + $0x2c] sm:$0xf]
  %v102 = vld [vmem:[%s1 + $0x30] sm:$0xf]
  %v103 = vld [vmem:[%s1 + $0x34] sm:$0xf]
  %v104 = vld [vmem:[%s1 + $0x38] sm:$0xf]
  %v105 = vld [vmem:[%s1 + $0x3c] sm:$0xf]
  %v106 = vld [vmem:[%s1 + $0x40] sm:$0xf]
  %v107 = vld [vmem:[%s1 + $0x44] sm:$0xf]
  %v108 = vld [vmem:[%s1 + $0x48] sm:$0xf]
  %v109 = vld [vmem:[%s1 + $0x4c] sm:$0xf]
  %v110 = vld [vmem:[%s1 + $0x50] sm:$0xf]
  %v111 = vld [vmem:[%s1 + $0x54] sm:$0xf]
  %v112 = vld [vmem:[%s1 + $0x58] sm:$0xf]
  %v113 = vld [vmem:[%s1 + $0x5c] sm:$0xf]
  %v114 = vld [vmem:[%s1 + $0x60] sm:$0xf]
  %v115 = vld [vmem:[%s1 + $0x64] sm:$0xf]
  %v116 = vld [vmem:[%s1 + $0x68] sm:$0xf]
  %v117 = vld [vmem:[%s1 + $0x6c] sm:$0xf]
  %v118 = vld [vmem:[%s1 + $0x70] sm:$0xf]
  %v119 = vld [vmem:[%s1 + $0x74] sm:$0xf]
  %v120 = vld [vmem:[%s1 + $0x78] sm:$0xf]
  %v121 = vld [vmem:[%s1 + $0x7c] sm:$0xf]
  %v122 = vunpack.c.l.bf16 %v90
  %v123 = vunpack.c.l.bf16 %v91
  %v124 = vunpack.c.l.bf16 %v92
  %v125 = vunpack.c.l.bf16 %v93
  %v126 = vunpack.c.l.bf16 %v94
  %v127 = vunpack.c.l.bf16 %v95
  %v128 = vunpack.c.l.bf16 %v96
  %v129 = vunpack.c.l.bf16 %v97
  %v130 = vunpack.c.l.bf16 %v98
  %v131 = vunpack.c.l.bf16 %v99
  %v132 = vunpack.c.l.bf16 %v100
  %v133 = vunpack.c.l.bf16 %v101
  %v134 = vunpack.c.l.bf16 %v102
  %v135 = vunpack.c.l.bf16 %v103
  %v136 = vunpack.c.l.bf16 %v104
  %v137 = vunpack.c.l.bf16 %v105
  %v138 = vunpack.c.l.bf16 %v106
  %v139 = vunpack.c.l.bf16 %v107
  %v140 = vunpack.c.l.bf16 %v108
  %v141 = vunpack.c.l.bf16 %v109
  %v142 = vunpack.c.l.bf16 %v110
  %v143 = vunpack.c.l.bf16 %v111
  %v144 = vunpack.c.l.bf16 %v112
  %v145 = vunpack.c.l.bf16 %v113
  %v146 = vunpack.c.l.bf16 %v114
  %v147 = vunpack.c.l.bf16 %v115
  %v148 = vunpack.c.l.bf16 %v116
  %v149 = vunpack.c.l.bf16 %v117
  %v150 = vunpack.c.l.bf16 %v118
  %v151 = vunpack.c.l.bf16 %v119
  %v152 = vunpack.c.l.bf16 %v120
  %v153 = vunpack.c.l.bf16 %v121
  %v154 = vld [vmem:[%s2] sm:$0xf]
  %v155 = vld [vmem:[%s2 + $0x4] sm:$0xf]
  %v156 = vld [vmem:[%s2 + $0x8] sm:$0xf]
  %v157 = vld [vmem:[%s2 + $0xc] sm:$0xf]
  %v158 = vunpack.c.l.bf16 %v154
  %v159 = vunpack.c.l.bf16 %v155
  %v160 = vunpack.c.l.bf16 %v156
  %v161 = vunpack.c.l.bf16 %v157
  %v162 = vld [vmem:[%s3] sm:$0xf]
  %v163 = vld [vmem:[%s3 + $0x4] sm:$0xf]
  %v164 = vld [vmem:[%s3 + $0x8] sm:$0xf]
  %v165 = vld [vmem:[%s3 + $0xc] sm:$0xf]
  %v166 = vunpack.c.l.bf16 %v162
  %v167 = vunpack.c.l.bf16 %v163
  %v168 = vunpack.c.l.bf16 %v164
  %v169 = vunpack.c.l.bf16 %v165
  %vm170 = vcmask 261120
  %v172 = vsel %vm170, %v166, 0
  %v175 = vsel %vm170, %v167, 0
  %v178 = vsel %vm170, %v168, 0
  %v181 = vsel %vm170, %v169, 0
  %v184 = vsel %vm170, %v122, 0
  %v187 = vsel %vm170, %v123, 0
  %v190 = vsel %vm170, %v124, 0
  %v193 = vsel %vm170, %v125, 0
  %v196 = vsel %vm170, %v126, 0
  %v199 = vsel %vm170, %v127, 0
  %v202 = vsel %vm170, %v128, 0
  %v205 = vsel %vm170, %v129, 0
  %v208 = vsel %vm170, %v130, 0
  %v211 = vsel %vm170, %v131, 0
  %v214 = vsel %vm170, %v132, 0
  %v217 = vsel %vm170, %v133, 0
  %v220 = vsel %vm170, %v134, 0
  %v223 = vsel %vm170, %v135, 0
  %v226 = vsel %vm170, %v136, 0
  %v229 = vsel %vm170, %v137, 0
  %v232 = vsel %vm170, %v138, 0
  %v235 = vsel %vm170, %v139, 0
  %v238 = vsel %vm170, %v140, 0
  %v241 = vsel %vm170, %v141, 0
  %v244 = vsel %vm170, %v142, 0
  %v247 = vsel %vm170, %v143, 0
  %v250 = vsel %vm170, %v144, 0
  %v253 = vsel %vm170, %v145, 0
  %v256 = vsel %vm170, %v146, 0
  %v259 = vsel %vm170, %v147, 0
  %v262 = vsel %vm170, %v148, 0
  %v265 = vsel %vm170, %v149, 0
  %v268 = vsel %vm170, %v150, 0
  %v271 = vsel %vm170, %v151, 0
  %v274 = vsel %vm170, %v152, 0
  %v277 = vsel %vm170, %v153, 0
  %279 = vmatprep.subr.mxu0 0.0
  %280 = vmatpush1.xpose.msra.mxu0 %v229
  %281 = vmatprep.subr.mxu0 0.0
  %282 = vmatpush1.xpose.msra.mxu0 %v226
  %283 = vmatprep.subr.mxu0 0.0
  %284 = vmatpush1.xpose.msra.mxu0 %v223
  %285 = vmatprep.subr.mxu0 0.0
  %286 = vmatpush1.xpose.msra.mxu0 %v220
  %287 = vmatprep.subr.mxu0 0.0
  %288 = vmatpush1.xpose.msra.mxu0 %v217
  %289 = vmatprep.subr.mxu0 0.0
  %290 = vmatpush1.xpose.msra.mxu0 %v214
  %291 = vmatprep.subr.mxu0 0.0
  %292 = vmatpush1.xpose.msra.mxu0 %v211
  %293 = vmatprep.subr.mxu0 0.0
  %294 = vmatpush1.xpose.msra.mxu0 %v208
  %295 = vmatprep.subr.mxu0 0.0
  %296 = vmatpush1.xpose.msra.mxu0 %v205
  %297 = vmatprep.subr.mxu0 0.0
  %298 = vmatpush1.xpose.msra.mxu0 %v202
  %299 = vmatprep.subr.mxu0 0.0
  %300 = vmatpush1.xpose.msra.mxu0 %v199
  %301 = vmatprep.subr.mxu0 0.0
  %302 = vmatpush1.xpose.msra.mxu0 %v196
  %303 = vmatprep.subr.mxu0 0.0
  %304 = vmatpush1.xpose.msra.mxu0 %v193
  %305 = vmatprep.subr.mxu0 0.0
  %306 = vmatpush1.xpose.msra.mxu0 %v190
  %307 = vmatprep.subr.mxu0 0.0
  %308 = vmatpush1.xpose.msra.mxu0 %v187
  %309 = vmatprep.subr.mxu0 0.0
  %310 = vmatpush1.xpose.msra.mxu0 %v184
  %311 = vmatprep.subr.mxu0 0.0
  %312 = vmatpush2.xpose.msra.mxu0 %v277
  %313 = vmatprep.subr.mxu0 0.0
  %314 = vmatpush2.xpose.msra.mxu0 %v274
  %315 = vmatprep.subr.mxu0 0.0
  %316 = vmatpush2.xpose.msra.mxu0 %v271
  %317 = vmatprep.subr.mxu0 0.0
  %318 = vmatpush2.xpose.msra.mxu0 %v268
  %319 = vmatprep.subr.mxu0 0.0
  %320 = vmatpush2.xpose.msra.mxu0 %v265
  %321 = vmatprep.subr.mxu0 0.0
  %322 = vmatpush2.xpose.msra.mxu0 %v262
  %323 = vmatprep.subr.mxu0 0.0
  %324 = vmatpush2.xpose.msra.mxu0 %v259
  %325 = vmatprep.subr.mxu0 0.0
  %326 = vmatpush2.xpose.msra.mxu0 %v256
  %327 = vmatprep.subr.mxu0 0.0
  %328 = vmatpush2.xpose.msra.mxu0 %v253
  %329 = vmatprep.subr.mxu0 0.0
  %330 = vmatpush2.xpose.msra.mxu0 %v250
  %331 = vmatprep.subr.mxu0 0.0
  %332 = vmatpush2.xpose.msra.mxu0 %v247
  %333 = vmatprep.subr.mxu0 0.0
  %334 = vmatpush2.xpose.msra.mxu0 %v244
  %335 = vmatprep.subr.mxu0 0.0
  %336 = vmatpush2.xpose.msra.mxu0 %v241
  %337 = vmatprep.subr.mxu0 0.0
  %338 = vmatpush2.xpose.msra.mxu0 %v238
  %339 = vmatprep.subr.mxu0 0.0
  %340 = vmatpush2.xpose.msra.mxu0 %v235
  %341 = vmatprep.subr.mxu0 0.0
  %342 = vmatpush2.xpose.msra.mxu0 %v232
  %343 = vmatprep.mubr.f32.mxu0 0.0
  %344 = vmatmul.mubr.f32.gmra.mxu0 %v172
  %v345 = vpop.f32.mrf.mxu0
  %v346 = vadd.f32 0.0, %v345
  %v347 = vpop.f32.mrf.mxu0
  %v348 = vadd.f32 0.0, %v347
  %349 = vmatprep.mubr.f32.mxu0 0.0
  %350 = vmatmul.mubr.f32.gmra.mxu0 %v175
  %v351 = vpop.f32.mrf.mxu0
  %v352 = vadd.f32 0.0, %v351
  %v353 = vpop.f32.mrf.mxu0
  %v354 = vadd.f32 0.0, %v353
  %355 = vmatprep.mubr.f32.mxu0 0.0
  %356 = vmatmul.mubr.f32.gmra.mxu0 %v178
  %v357 = vpop.f32.mrf.mxu0
  %v358 = vadd.f32 0.0, %v357
  %v359 = vpop.f32.mrf.mxu0
  %v360 = vadd.f32 0.0, %v359
  %361 = vmatprep.mubr.f32.mxu0 0.0
  %362 = vmatmul.mubr.f32.gmra.mxu0 %v181
  %v363 = vpop.f32.mrf.mxu0
  %v364 = vadd.f32 0.0, %v363
  %v365 = vpop.f32.mrf.mxu0
  %v366 = vadd.f32 0.0, %v365
  %367 = vdwg.mxu0
  %v369 = vsel %vm170, %v158, 0
  %v372 = vsel %vm170, %v159, 0
  %v375 = vsel %vm170, %v160, 0
  %v378 = vsel %vm170, %v161, 0
  %v381 = vsel %vm170, %v58, 0
  %v384 = vsel %vm170, %v59, 0
  %v387 = vsel %vm170, %v60, 0
  %v390 = vsel %vm170, %v61, 0
  %v393 = vsel %vm170, %v62, 0
  %v396 = vsel %vm170, %v63, 0
  %v399 = vsel %vm170, %v64, 0
  %v402 = vsel %vm170, %v65, 0
  %v405 = vsel %vm170, %v66, 0
  %v408 = vsel %vm170, %v67, 0
  %v411 = vsel %vm170, %v68, 0
  %v414 = vsel %vm170, %v69, 0
  %v417 = vsel %vm170, %v70, 0
  %v420 = vsel %vm170, %v71, 0
  %v423 = vsel %vm170, %v72, 0
  %v426 = vsel %vm170, %v73, 0
  %v429 = vsel %vm170, %v74, 0
  %v432 = vsel %vm170, %v75, 0
  %v435 = vsel %vm170, %v76, 0
  %v438 = vsel %vm170, %v77, 0
  %v441 = vsel %vm170, %v78, 0
  %v444 = vsel %vm170, %v79, 0
  %v447 = vsel %vm170, %v80, 0
  %v450 = vsel %vm170, %v81, 0
  %v453 = vsel %vm170, %v82, 0
  %v456 = vsel %vm170, %v83, 0
  %v459 = vsel %vm170, %v84, 0
  %v462 = vsel %vm170, %v85, 0
  %v465 = vsel %vm170, %v86, 0
  %v468 = vsel %vm170, %v87, 0
  %v471 = vsel %vm170, %v88, 0
  %v474 = vsel %vm170, %v89, 0
  %476 = vmatprep.subr.mxu0 0.0
  %477 = vmatpush1.xpose.msra.mxu0 %v426
  %478 = vmatprep.subr.mxu0 0.0
  %479 = vmatpush1.xpose.msra.mxu0 %v423
  %480 = vmatprep.subr.mxu0 0.0
  %481 = vmatpush1.xpose.msra.mxu0 %v420
  %482 = vmatprep.subr.mxu0 0.0
  %483 = vmatpush1.xpose.msra.mxu0 %v417
  %484 = vmatprep.subr.mxu0 0.0
  %485 = vmatpush1.xpose.msra.mxu0 %v414
  %486 = vmatprep.subr.mxu0 0.0
  %487 = vmatpush1.xpose.msra.mxu0 %v411
  %488 = vmatprep.subr.mxu0 0.0
  %489 = vmatpush1.xpose.msra.mxu0 %v408
  %490 = vmatprep.subr.mxu0 0.0
  %491 = vmatpush1.xpose.msra.mxu0 %v405
  %492 = vmatprep.subr.mxu0 0.0
  %493 = vmatpush1.xpose.msra.mxu0 %v402
  %494 = vmatprep.subr.mxu0 0.0
  %495 = vmatpush1.xpose.msra.mxu0 %v399
  %496 = vmatprep.subr.mxu0 0.0
  %497 = vmatpush1.xpose.msra.mxu0 %v396
  %498 = vmatprep.subr.mxu0 0.0
  %499 = vmatpush1.xpose.msra.mxu0 %v393
  %500 = vmatprep.subr.mxu0 0.0
  %501 = vmatpush1.xpose.msra.mxu0 %v390
  %502 = vmatprep.subr.mxu0 0.0
  %503 = vmatpush1.xpose.msra.mxu0 %v387
  %504 = vmatprep.subr.mxu0 0.0
  %505 = vmatpush1.xpose.msra.mxu0 %v384
  %506 = vmatprep.subr.mxu0 0.0
  %507 = vmatpush1.xpose.msra.mxu0 %v381
  %508 = vmatprep.subr.mxu0 0.0
  %509 = vmatpush2.xpose.msra.mxu0 %v474
  %510 = vmatprep.subr.mxu0 0.0
  %511 = vmatpush2.xpose.msra.mxu0 %v471
  %512 = vmatprep.subr.mxu0 0.0
  %513 = vmatpush2.xpose.msra.mxu0 %v468
  %514 = vmatprep.subr.mxu0 0.0
  %515 = vmatpush2.xpose.msra.mxu0 %v465
  %516 = vmatprep.subr.mxu0 0.0
  %517 = vmatpush2.xpose.msra.mxu0 %v462
  %518 = vmatprep.subr.mxu0 0.0
  %519 = vmatpush2.xpose.msra.mxu0 %v459
  %520 = vmatprep.subr.mxu0 0.0
  %521 = vmatpush2.xpose.msra.mxu0 %v456
  %522 = vmatprep.subr.mxu0 0.0
  %523 = vmatpush2.xpose.msra.mxu0 %v453
  %524 = vmatprep.subr.mxu0 0.0
  %525 = vmatpush2.xpose.msra.mxu0 %v450
  %526 = vmatprep.subr.mxu0 0.0
  %527 = vmatpush2.xpose.msra.mxu0 %v447
  %528 = vmatprep.subr.mxu0 0.0
  %529 = vmatpush2.xpose.msra.mxu0 %v444
  %530 = vmatprep.subr.mxu0 0.0
  %531 = vmatpush2.xpose.msra.mxu0 %v441
  %532 = vmatprep.subr.mxu0 0.0
  %533 = vmatpush2.xpose.msra.mxu0 %v438
  %534 = vmatprep.subr.mxu0 0.0
  %535 = vmatpush2.xpose.msra.mxu0 %v435
  %536 = vmatprep.subr.mxu0 0.0
  %537 = vmatpush2.xpose.msra.mxu0 %v432
  %538 = vmatprep.subr.mxu0 0.0
  %539 = vmatpush2.xpose.msra.mxu0 %v429
  %540 = vmatprep.mubr.f32.mxu0 0.0
  %541 = vmatmul.mubr.f32.gmra.mxu0 %v369
  %v542 = vpop.f32.mrf.mxu0
  %v543 = vadd.f32 %v346, %v542
  %v544 = vpop.f32.mrf.mxu0
  %v545 = vadd.f32 %v348, %v544
  %546 = vmatprep.mubr.f32.mxu0 0.0
  %547 = vmatmul.mubr.f32.gmra.mxu0 %v372
  %v548 = vpop.f32.mrf.mxu0
  %v549 = vadd.f32 %v352, %v548
  %v550 = vpop.f32.mrf.mxu0
  %v551 = vadd.f32 %v354, %v550
  %552 = vmatprep.mubr.f32.mxu0 0.0
  %553 = vmatmul.mubr.f32.gmra.mxu0 %v375
  %v554 = vpop.f32.mrf.mxu0
  %v555 = vadd.f32 %v358, %v554
  %v556 = vpop.f32.mrf.mxu0
  %v557 = vadd.f32 %v360, %v556
  %558 = vmatprep.mubr.f32.mxu0 0.0
  %559 = vmatmul.mubr.f32.gmra.mxu0 %v378
  %v560 = vpop.f32.mrf.mxu0
  %v561 = vadd.f32 %v364, %v560
  %v562 = vpop.f32.mrf.mxu0
  %v563 = vadd.f32 %v366, %v562
  %564 = vdwg.mxu0
  %v565 = vld [vmem:[%s4] sm:$0xff]
  %v566 = vld [vmem:[%s4 + $0x8] sm:$0xff]
  %v567 = vld [vmem:[%s4 + $0x10] sm:$0xff]
  %v568 = vld [vmem:[%s4 + $0x18] sm:$0xff]
  %570 = vset.pattern.permute.xlu0 0
  %571 = vperm.xlu0 %570, %v565
  %v572 = vpop.permute.xlu0 %571
  %575 = vset.pattern.permute.xlu0 0
  %576 = vperm.xlu0 %575, %v566
  %v577 = vpop.permute.xlu0 %576
  %580 = vset.pattern.permute.xlu0 0
  %581 = vperm.xlu0 %580, %v567
  %v582 = vpop.permute.xlu0 %581
  %585 = vset.pattern.permute.xlu0 0
  %586 = vperm.xlu0 %585, %v568
  %v587 = vpop.permute.xlu0 %586
  %v589 = vadd.f32 %v543, %v572
  %v590 = vadd.f32 %v545, %v572
  %v591 = vadd.f32 %v549, %v577
  %v592 = vadd.f32 %v551, %v577
  %v593 = vadd.f32 %v555, %v582
  %v594 = vadd.f32 %v557, %v582
  %v595 = vadd.f32 %v561, %v587
  %v596 = vadd.f32 %v563, %v587
  %v597 = vmax.f32 %v589, 0.0
  %v598 = vmax.f32 %v590, 0.0
  %v599 = vmax.f32 %v591, 0.0
  %v600 = vmax.f32 %v592, 0.0
  %v601 = vmax.f32 %v593, 0.0
  %v602 = vmax.f32 %v594, 0.0
  %v603 = vmax.f32 %v595, 0.0
  %v604 = vmax.f32 %v596, 0.0
  %v605 = vld [vmem:[%s5] sm:$0xf]
  %v606 = vunpack.c.l.bf16 %v605
  %v607 = vld [vmem:[%s6] sm:$0xff]
  %609 = vset.pattern.permute.xlu0 0
  %610 = vperm.xlu0 %609, %v607
  %v611 = vpop.permute.xlu0 %610
  %v614 = vsel %vm170, %v606, 0
  %616 = vmatprep.subr.mxu0 0.0
  %617 = vmatpush1.msra.mxu0 0.0
  %618 = vmatprep.subr.mxu0 0.0
  %619 = vmatpush1.msra.mxu0 0.0
  %620 = vmatprep.subr.mxu0 0.0
  %621 = vmatpush1.msra.mxu0 0.0
  %622 = vmatprep.subr.mxu0 0.0
  %623 = vmatpush1.msra.mxu0 0.0
  %624 = vmatprep.subr.mxu0 0.0
  %625 = vmatpush1.msra.mxu0 0.0
  %626 = vmatprep.subr.mxu0 0.0
  %627 = vmatpush1.msra.mxu0 0.0
  %628 = vmatprep.subr.mxu0 0.0
  %629 = vmatpush1.msra.mxu0 0.0
  %630 = vmatprep.subr.mxu0 0.0
  %631 = vmatpush1.msra.mxu0 0.0
  %632 = vmatprep.subr.mxu0 0.0
  %633 = vmatpush1.msra.mxu0 0.0
  %634 = vmatprep.subr.mxu0 0.0
  %635 = vmatpush1.msra.mxu0 0.0
  %636 = vmatprep.subr.mxu0 0.0
  %637 = vmatpush1.msra.mxu0 0.0
  %638 = vmatprep.subr.mxu0 0.0
  %639 = vmatpush1.msra.mxu0 0.0
  %640 = vmatprep.subr.mxu0 %v604
  %641 = vmatpush1.msra.mxu0 %v603
  %642 = vmatprep.subr.mxu0 %v602
  %643 = vmatpush1.msra.mxu0 %v601
  %644 = vmatprep.subr.mxu0 %v600
  %645 = vmatpush1.msra.mxu0 %v599
  %646 = vmatprep.subr.mxu0 %v598
  %647 = vmatpush1.msra.mxu0 %v597
  %648 = vmatprep.subr.mxu0 0.0
  %649 = vmatpush2.msra.mxu0 0.0
  %650 = vmatprep.subr.mxu0 0.0
  %651 = vmatpush2.msra.mxu0 0.0
  %652 = vmatprep.subr.mxu0 0.0
  %653 = vmatpush2.msra.mxu0 0.0
  %654 = vmatprep.subr.mxu0 0.0
  %655 = vmatpush2.msra.mxu0 0.0
  %656 = vmatprep.subr.mxu0 0.0
  %657 = vmatpush2.msra.mxu0 0.0
  %658 = vmatprep.subr.mxu0 0.0
  %659 = vmatpush2.msra.mxu0 0.0
  %660 = vmatprep.subr.mxu0 0.0
  %661 = vmatpush2.msra.mxu0 0.0
  %662 = vmatprep.subr.mxu0 0.0
  %663 = vmatpush2.msra.mxu0 0.0
  %664 = vmatprep.subr.mxu0 0.0
  %665 = vmatpush2.msra.mxu0 0.0
  %666 = vmatprep.subr.mxu0 0.0
  %667 = vmatpush2.msra.mxu0 0.0
  %668 = vmatprep.subr.mxu0 0.0
  %669 = vmatpush2.msra.mxu0 0.0
  %670 = vmatprep.subr.mxu0 0.0
  %671 = vmatpush2.msra.mxu0 0.0
  %672 = vmatprep.subr.mxu0 0.0
  %673 = vmatpush2.msra.mxu0 0.0
  %674 = vmatprep.subr.mxu0 0.0
  %675 = vmatpush2.msra.mxu0 0.0
  %676 = vmatprep.subr.mxu0 0.0
  %677 = vmatpush2.msra.mxu0 0.0
  %678 = vmatprep.subr.mxu0 0.0
  %679 = vmatpush2.msra.mxu0 0.0
  %680 = vmatprep.mubr.f32.mxu0 0.0
  %681 = vmatmul.mubr.f32.gmra.mxu0 %v614
  %v682 = vpop.f32.mrf.mxu0
  %v683 = vadd.f32 %v611, %v682
  %v684 = vpop.f32.mrf.mxu0
  %v685 = vadd.f32 %v611, %v684
  %686 = vdwg.mxu0
  %687 = vst [vmem:[%s7] sm:$0xff] %v683
  %688 = vst [vmem:[%s7 + $0x8] sm:$0xff] %v685
  // Predicated region
  $region30: #{link_predictor_forward.1} parent=0 // pred_check
    _
  $region31: #{link_predictor_forward.1} parent=0 // pred_check_branch
    %690 = sbr.rel (0) target = $region33
  $region32: #{link_predictor_forward.1} parent=0 // pred_region
    _
  $region33: #{link_predictor_forward.1} parent=0 // pred_fallthru
    _
  // Predicated region
  $region34: #{link_predictor_forward.1} parent=0 // pred_check
    _
  $region35: #{link_predictor_forward.1} parent=0 // pred_check_branch
    %692 = sbr.rel (0) target = $region37
  $region36: #{link_predictor_forward.1} parent=0 // pred_region
    _
  $region37: #{link_predictor_forward.1} parent=0 // pred_fallthru
    _

</llo_original>
